<compile_context>
chip_gen: v6e
topology: v6e:2x2x1
jax: 0.10.0
libtpu: 0.0.40
codegen_flags: <defaults>
</compile_context>

<pallas_src>
import functools

import jax
import jax.numpy as jnp
import numpy as np
from jax import lax
from jax.experimental import pallas as pl
from jax.experimental.pallas import tpu as pltpu

ALPHA = 0.7
BETTA = 0.3
_NORM_EPS = 1e-8        # mask threshold on ||vec_1||


def _nan_to_num(x):
    # torch.nan_to_num(x, nan=0.0, posinf=0.1, neginf=-0.1)
    x = jnp.where(jnp.isnan(x), jnp.float32(0.0), x)
    x = jnp.where(x == jnp.inf, jnp.float32(0.1), x)
    x = jnp.where(x == -jnp.inf, jnp.float32(-0.1), x)
    return x


def _rotation_loss_kernel(v1_ref, v2_ref, sum_ref, cnt_ref, acc_ref, cntacc_ref, *,
                          n_rows, sqrt_alpha, sqrt_betta):
    s = pl.program_id(0)       # batch split (parallel across TensorCores on v7x)
    i = pl.program_id(1)       # reduction step within the split (arbitrary)
    steps = pl.num_programs(1)

    @pl.when(i == 0)
    def _init():
        acc_ref[...] = jnp.zeros_like(acc_ref)
        cntacc_ref[...] = jnp.zeros_like(cntacc_ref)

    v1 = v1_ref[...].astype(jnp.float32)            # [T, D]
    v2 = v2_ref[...].astype(jnp.float32)            # [T, D]
    t, d = v1.shape

    # Per-row lane reductions (XLU); everything else stays on the VPU/EUP.
    norm1_sq = jnp.sum(v1 * v1, axis=-1, keepdims=True)        # ||v1||^2   [T,1]
    norm2_sq = jnp.sum(v2 * v2, axis=-1, keepdims=True)        # ||v2||^2   [T,1]
    dot12 = jnp.sum(v1 * v2, axis=-1, keepdims=True)           # <v1, v2>   [T,1]

    # Valid rows: ||vec_1|| > 1e-8 AND inside the original (unpadded) batch.
    # Phantom tiles (uneven split) land fully beyond n_rows and contribute nothing.
    row0 = (s * steps + i) * t
    row_idx = row0 + lax.broadcasted_iota(jnp.int32, (t, 1), 0)
    valid = (norm1_sq > jnp.float32(_NORM_EPS * _NORM_EPS)) & (row_idx < n_rows)

    inv_n1 = lax.rsqrt(norm1_sq)                               # 1/||v1||  (EUP)
    inv_n2 = lax.rsqrt(norm2_sq)                               # 1/||v2||
    n1 = v1 * inv_n1                                           # unit(v1)

    # angle(v1, v2): cos = clamp(<u1,u2>, -1, 1); sin = sqrt(1 - cos^2)
    cos_a = jnp.clip(dot12 * inv_n1 * inv_n2, -1.0, 1.0)
    sin_a = jnp.sqrt(jnp.maximum(1.0 - cos_a * cos_a, 0.0))
    cos_a_m1 = cos_a - 1.0

    # Gram-Schmidt second axis: n2 = unit(v2 - n1 * <n1, v2>), <n1,v2> = <v1,v2>/||v1||
    proj = dot12 * inv_n1
    w = v2 - n1 * proj
    n2 = w * lax.rsqrt(jnp.sum(w * w, axis=-1, keepdims=True))

    s1 = jnp.sum(n1, axis=-1, keepdims=True)                   # sum_k n1[k]
    s2 = jnp.sum(n2, axis=-1, keepdims=True)                   # sum_k n2[k]

    # Fold all per-row scalars (incl. sqrt(alpha)/sqrt(betta)) BEFORE broadcasting to
    # [T, D]; assumes alpha, betta >= 0 (module defaults 0.7 / 0.3).
    a1 = (sqrt_alpha * sin_a) * s1                              # [T,1]
    a2 = (sqrt_alpha * sin_a) * s2
    b1 = (sqrt_betta * cos_a_m1) * s1
    b2 = (sqrt_betta * cos_a_m1) * s2

    ua = n2 * a1 - n1 * a2            # = sqrt(alpha)   * bmm(transform_a, ones)
    ub = n1 * b1 + n2 * b2            # = sqrt(betta)   * bmm(transform_b, ones)
    # bmm(I, ones) == ones, so mse(ones, ones) contributes exactly 0.
    contrib = ua * ua + ub * ub                                 # [T, D]

    # One full-width select squashes NaN/garbage from masked rows and padded/phantom
    # tiles (rsqrt(0)=inf chains, out-of-range block contents). Valid-but-degenerate
    # rows keep their NaN, matching torch (NaN mean -> nan_to_num -> 0).
    contrib = jnp.where(valid, contrib, jnp.float32(0.0))

    # Fold tile rows down to 8 sublanes (vreg-aligned regrouping) so the accumulator
    # read-modify-write is a single (8, D) slab per step, independent of tile_rows.
    acc_ref[...] += contrib.reshape(t // 8, 8, d).sum(axis=0)
    cntacc_ref[...] += jnp.sum(jnp.where(valid, jnp.float32(1.0),
                                         jnp.float32(0.0))).reshape(1, 1)

    @pl.when(i == steps - 1)
    def _finalize():
        sum_ref[...] = jnp.sum(acc_ref[...], axis=0, keepdims=True)   # (1, D) partial sum
        cnt_ref[...] = cntacc_ref[...]                                 # (1, 1) valid count


def transformation_rotation_loss(vec_1, vec_2, alpha=ALPHA, betta=BETTA,
                                 tile_rows=None):
    """Forward pass of TransformationRotationLoss. Returns a [D] loss vector."""
    n, d = vec_1.shape
    itemsize = vec_1.dtype.itemsize   # keep inputs in native (possibly bf16) dtype

    # Generation-aware VMEM budget: ~48 MiB on v7x (64 MiB/core), ~96 MiB on v5e/v6e.
    try:
        vmem_cap = int(pltpu.get_tpu_info().vmem_capacity_bytes)
    except Exception:
        vmem_cap = 64 << 20            # conservative fallback (v7x per-core VMEM)
    vmem_budget = min(vmem_cap * 3 // 4, 100 << 20)

    if tile_rows is None:
        # Per-row VMEM cost: 2 inputs x 2 pipeline buffers (input dtype) plus roughly
        # 6 live f32 [T, D] intermediates inside the body; the (8, D) accumulator
        # scratch no longer scales with tile_rows.
        bytes_per_row = d * (4 * itemsize + 6 * 4)
        t = vmem_budget // max(bytes_per_row, 1)
        t = max(8, min(4096, (t // 8) * 8))
        tile_rows = int(min(t, ((n + 7) // 8) * 8))
    assert tile_rows >= 8 and tile_rows % 8 == 0

    n_tiles = pl.cdiv(n, tile_rows)
    # Leading parallel axis: lets v7x's two TensorCores each reduce half the batch.
    num_splits = 2 if n_tiles >= 2 else 1
    steps_per_split = pl.cdiv(n_tiles, num_splits)

    def in_map(s, i):
        tile = s * steps_per_split + i
        # Clamp phantom tiles (uneven split) into range; they are fully row-masked.
        return (jnp.minimum(tile, n_tiles - 1), 0)

    kernel = functools.partial(
        _rotation_loss_kernel, n_rows=n,
        sqrt_alpha=float(np.sqrt(alpha)), sqrt_betta=float(np.sqrt(betta)))

    sums, counts = pl.pallas_call(
        kernel,
        out_shape=(jax.ShapeDtypeStruct((num_splits, 1, d), jnp.float32),
                   jax.ShapeDtypeStruct((num_splits, 1, 1), jnp.float32)),
        grid=(num_splits, steps_per_split),
        in_specs=[
            pl.BlockSpec((tile_rows, d), in_map),
            pl.BlockSpec((tile_rows, d), in_map),
        ],
        # Per-split lane-dense (1, D) partial sum + (1, 1) valid-row count, resident
        # across the reduction axis (same block index for all i).
        out_specs=(
            pl.BlockSpec((None, 1, d), lambda s, i: (s, 0, 0)),
            pl.BlockSpec((None, 1, 1), lambda s, i: (s, 0, 0)),
        ),
        scratch_shapes=[
            pltpu.VMEM((8, d), jnp.float32),   # per-feature loss accumulator
            pltpu.VMEM((1, 1), jnp.float32),   # valid-row count accumulator
        ],
        compiler_params=pltpu.CompilerParams(
            dimension_semantics=("parallel", "arbitrary"),
            vmem_limit_bytes=int(min(vmem_cap, vmem_budget + (8 << 20)))),
    )(vec_1, vec_2)

    # Tiny JAX epilogue: combine per-core partials, divide by the valid-row count
    # (0/0 -> NaN when no row passes the mask, as in torch), then nan_to_num.
    total = jnp.sum(sums.reshape(num_splits, d), axis=0)
    count = jnp.sum(counts)
    return _nan_to_num(total / count)


def transformation_rotation_loss_reference(vec_1, vec_2, alpha=ALPHA, betta=BETTA):
    """Pure-JAX literal transcription of the torch forward (eager boolean filtering)."""
    v1 = jnp.asarray(vec_1, jnp.float32)
    v2 = jnp.asarray(vec_2, jnp.float32)
    mask = jnp.linalg.norm(v1, axis=-1) > _NORM_EPS
    v1 = v1[mask]
    v2 = v2[mask]

    def unit(v):
        return v / jnp.linalg.norm(v, axis=-1, keepdims=True)

    a = jnp.arccos(jnp.clip(jnp.sum(unit(v1) * unit(v2), axis=-1), -1.0, 1.0))
    n1 = unit(v1)
    n2 = unit(v2 - n1 * jnp.sum(n1 * v2, axis=1, keepdims=True))
    sin_a = jnp.sin(a)[:, None, None]
    cos_a_m1 = (jnp.cos(a) - 1.0)[:, None, None]
    n2n1T = n2[:, :, None] * n1[:, None, :]
    n1n2T = n1[:, :, None] * n2[:, None, :]
    n1n1T = n1[:, :, None] * n1[:, None, :]
    n2n2T = n2[:, :, None] * n2[:, None, :]
    transform_a = (n2n1T - n1n2T) * sin_a
    transform_b = (n1n1T + n2n2T) * cos_a_m1
    u = jnp.ones_like(v1)
    i_mat = jnp.broadcast_to(jnp.eye(v1.shape[-1], dtype=jnp.float32),
                             (v1.shape[0], v1.shape[-1], v1.shape[-1]))
    u_a = jnp.einsum('bij,bj->bi', transform_a, u)
    u_b = jnp.einsum('bij,bj->bi', transform_b, u)
    u_i = jnp.einsum('bij,bj->bi', i_mat, u)
    loss = (u_i - 1.0) ** 2 + alpha * u_a ** 2 + betta * u_b ** 2
    loss = jnp.mean(loss, axis=0)
    return jnp.nan_to_num(loss, nan=0.0, posinf=0.1, neginf=-0.1)


if __name__ == "__main__":
    N, D = 24, 128
    key = jax.random.PRNGKey(0)
    k1, k2 = jax.random.split(key, 2)
    vec_1 = jax.random.normal(k1, (N, D), dtype=jnp.float32)
    vec_2 = jax.random.normal(k2, (N, D), dtype=jnp.float32)
    # Zero two rows of vec_1 so the ||vec_1|| > 1e-8 row filter is exercised.
    vec_1 = vec_1.at[3].set(0.0)
    vec_1 = vec_1.at[17].set(0.0)

    ref = transformation_rotation_loss_reference(vec_1, vec_2)

    # Default tiling: single tile covering the whole (small) batch.
    loss_default = transformation_rotation_loss(vec_1, vec_2)
    jax.block_until_ready(loss_default)
    assert loss_default.shape == (D,)
    assert np.allclose(np.asarray(loss_default), np.asarray(ref),
                       rtol=1e-4, atol=1e-6), (
        float(np.max(np.abs(np.asarray(loss_default) - np.asarray(ref)))))

    # tile_rows=8 -> 3 tiles -> 2 splits x 2 steps (one fully-masked phantom tile),
    # exercising the dual-core split, tiled accumulator and finalize paths.
    loss_tiled = transformation_rotation_loss(vec_1, vec_2, tile_rows=8)
    jax.block_until_ready(loss_tiled)
    assert np.allclose(np.asarray(loss_tiled), np.asarray(ref),
                       rtol=1e-4, atol=1e-6), (
        float(np.max(np.abs(np.asarray(loss_tiled) - np.asarray(ref)))))

    print("KERNEL_OK")
</pallas_src>

<mosaic_0001>
module attributes {stable_mosaic.version = 11 : i64} {
  func.func @_rotation_loss_kernel(%arg0: i32, %arg1: i32, %arg2: memref<24x128xf32, #tpu.memory_space<vmem>>, %arg3: memref<24x128xf32, #tpu.memory_space<vmem>>, %arg4: memref<1x1x128xf32, #tpu.memory_space<vmem>>, %arg5: memref<1x1x1xf32, #tpu.memory_space<vmem>>, %arg6: memref<8x128xf32, #tpu.memory_space<vmem>>, %arg7: memref<1x1xf32, #tpu.memory_space<vmem>>) attributes {dimension_semantics = [#tpu.dimension_semantics<parallel>, #tpu.dimension_semantics<arbitrary>], iteration_bounds = array<i64: 1, 1>, scalar_prefetch = 0 : i64, scratch_operands = 2 : i64, tpu.core_type = #tpu.core_type<tc>, window_params = [{transform_indices = @transform_0, window_bounds = array<i64: 24, 128>}, {transform_indices = @transform_1, window_bounds = array<i64: 24, 128>}, {transform_indices = @transform_2, window_bounds = array<i64: 1, 1, 128>}, {transform_indices = @transform_3, window_bounds = array<i64: 1, 1, 1>}]} {
    %c0_i32 = arith.constant 0 : i32
    %0 = arith.cmpi eq, %arg1, %c0_i32 : i32
    %1 = arith.extui %0 : i1 to i32
    %c0_i32_0 = arith.constant 0 : i32
    %2 = arith.cmpi ne, %1, %c0_i32_0 : i32
    scf.if %2 {
      %cst_35 = arith.constant 0.000000e+00 : f32
      %105 = vector.broadcast %cst_35 : f32 to vector<8x128xf32>
      %c0_36 = arith.constant 0 : index
      %c0_37 = arith.constant 0 : index
      %106 = vector.load %arg6[%c0_36, %c0_37] : memref<8x128xf32, #tpu.memory_space<vmem>>, vector<8x128xf32>
      tpu.vector_store %arg6[%c0_36, %c0_37], %105 {strides = array<i32>} : memref<8x128xf32, #tpu.memory_space<vmem>>, vector<8x128xf32>,
      %cst_38 = arith.constant 0.000000e+00 : f32
      %107 = vector.broadcast %cst_38 : f32 to vector<1x1xf32>
      %c0_39 = arith.constant 0 : index
      %c0_40 = arith.constant 0 : index
      %108 = vector.load %arg7[%c0_39, %c0_40] : memref<1x1xf32, #tpu.memory_space<vmem>>, vector<1x1xf32>
      tpu.vector_store %arg7[%c0_39, %c0_40], %107 {strides = array<i32>} : memref<1x1xf32, #tpu.memory_space<vmem>>, vector<1x1xf32>,
    } else {
    }
    %c0 = arith.constant 0 : index
    %c0_1 = arith.constant 0 : index
    %3 = vector.load %arg2[%c0, %c0_1] : memref<24x128xf32, #tpu.memory_space<vmem>>, vector<24x128xf32>
    %c0_2 = arith.constant 0 : index
    %c0_3 = arith.constant 0 : index
    %4 = vector.load %arg3[%c0_2, %c0_3] : memref<24x128xf32, #tpu.memory_space<vmem>>, vector<24x128xf32>
    %5 = arith.mulf %3, %3 : vector<24x128xf32>
    %cst = arith.constant dense<0.000000e+00> : vector<24xf32>
    %6 = vector.multi_reduction <add>, %5, %cst [1] : vector<24x128xf32> to vector<24xf32>
    %7 = vector.shape_cast %6 : vector<24xf32> to vector<24x1xf32>
    %8 = arith.mulf %4, %4 : vector<24x128xf32>
    %cst_4 = arith.constant dense<0.000000e+00> : vector<24xf32>
    %9 = vector.multi_reduction <add>, %8, %cst_4 [1] : vector<24x128xf32> to vector<24xf32>
    %10 = vector.shape_cast %9 : vector<24xf32> to vector<24x1xf32>
    %11 = arith.mulf %3, %4 : vector<24x128xf32>
    %cst_5 = arith.constant dense<0.000000e+00> : vector<24xf32>
    %12 = vector.multi_reduction <add>, %11, %cst_5 [1] : vector<24x128xf32> to vector<24xf32>
    %13 = vector.shape_cast %12 : vector<24xf32> to vector<24x1xf32>
    %c1_i32 = arith.constant 1 : i32
    %14 = arith.muli %arg0, %c1_i32 : i32
    %15 = arith.addi %14, %arg1 : i32
    %c24_i32 = arith.constant 24 : i32
    %16 = arith.muli %15, %c24_i32 : i32
    %17 = tpu.iota {dimensions = array<i32: 0>} : vector<24x1xi32>
    %18 = vector.broadcast %16 : i32 to vector<24x1xi32>
    %19 = arith.addi %18, %17 : vector<24x1xi32>
    %cst_6 = arith.constant 1.000000e-16 : f32
    %20 = vector.broadcast %cst_6 : f32 to vector<24x1xf32>
    %21 = arith.cmpf ogt, %7, %20 : vector<24x1xf32>
    %c24_i32_7 = arith.constant 24 : i32
    %22 = vector.broadcast %c24_i32_7 : i32 to vector<24x1xi32>
    %23 = arith.cmpi slt, %19, %22 : vector<24x1xi32>
    %24 = arith.andi %21, %23 : vector<24x1xi1>
    %25 = math.rsqrt %7 : vector<24x1xf32>
    %26 = math.rsqrt %10 : vector<24x1xf32>
    %27 = vector.broadcast %25 : vector<24x1xf32> to vector<24x128xf32>
    %28 = arith.mulf %3, %27 : vector<24x128xf32>
    %29 = arith.mulf %13, %25 : vector<24x1xf32>
    %30 = arith.mulf %29, %26 : vector<24x1xf32>
    %cst_8 = arith.constant -1.000000e+00 : f32
    %cst_9 = arith.constant 1.000000e+00 : f32
    %31 = vector.broadcast %cst_8 : f32 to vector<24x1xf32>
    %32 = arith.maximumf %31, %30 : vector<24x1xf32>
    %33 = vector.broadcast %cst_9 : f32 to vector<24x1xf32>
    %34 = arith.minimumf %33, %32 : vector<24x1xf32>
    %35 = arith.mulf %34, %34 : vector<24x1xf32>
    %cst_10 = arith.constant 1.000000e+00 : f32
    %36 = vector.broadcast %cst_10 : f32 to vector<24x1xf32>
    %37 = arith.subf %36, %35 : vector<24x1xf32>
    %cst_11 = arith.constant 0.000000e+00 : f32
    %38 = vector.broadcast %cst_11 : f32 to vector<24x1xf32>
    %39 = arith.maximumf %37, %38 : vector<24x1xf32>
    %40 = math.sqrt %39 : vector<24x1xf32>
    %cst_12 = arith.constant 1.000000e+00 : f32
    %41 = vector.broadcast %cst_12 : f32 to vector<24x1xf32>
    %42 = arith.subf %34, %41 : vector<24x1xf32>
    %43 = arith.mulf %13, %25 : vector<24x1xf32>
    %44 = vector.broadcast %43 : vector<24x1xf32> to vector<24x128xf32>
    %45 = arith.mulf %28, %44 : vector<24x128xf32>
    %46 = arith.subf %4, %45 : vector<24x128xf32>
    %47 = arith.mulf %46, %46 : vector<24x128xf32>
    %cst_13 = arith.constant dense<0.000000e+00> : vector<24xf32>
    %48 = vector.multi_reduction <add>, %47, %cst_13 [1] : vector<24x128xf32> to vector<24xf32>
    %49 = vector.shape_cast %48 : vector<24xf32> to vector<24x1xf32>
    %50 = math.rsqrt %49 : vector<24x1xf32>
    %51 = vector.broadcast %50 : vector<24x1xf32> to vector<24x128xf32>
    %52 = arith.mulf %46, %51 : vector<24x128xf32>
    %cst_14 = arith.constant dense<0.000000e+00> : vector<24xf32>
    %53 = vector.multi_reduction <add>, %28, %cst_14 [1] : vector<24x128xf32> to vector<24xf32>
    %54 = vector.shape_cast %53 : vector<24xf32> to vector<24x1xf32>
    %cst_15 = arith.constant dense<0.000000e+00> : vector<24xf32>
    %55 = vector.multi_reduction <add>, %52, %cst_15 [1] : vector<24x128xf32> to vector<24xf32>
    %56 = vector.shape_cast %55 : vector<24xf32> to vector<24x1xf32>
    %cst_16 = arith.constant 8.366600e-01 : f32
    %57 = vector.broadcast %cst_16 : f32 to vector<24x1xf32>
    %58 = arith.mulf %57, %40 : vector<24x1xf32>
    %59 = arith.mulf %58, %54 : vector<24x1xf32>
    %cst_17 = arith.constant 8.366600e-01 : f32
    %60 = vector.broadcast %cst_17 : f32 to vector<24x1xf32>
    %61 = arith.mulf %60, %40 : vector<24x1xf32>
    %62 = arith.mulf %61, %56 : vector<24x1xf32>
    %cst_18 = arith.constant 0.547722578 : f32
    %63 = vector.broadcast %cst_18 : f32 to vector<24x1xf32>
    %64 = arith.mulf %63, %42 : vector<24x1xf32>
    %65 = arith.mulf %64, %54 : vector<24x1xf32>
    %cst_19 = arith.constant 0.547722578 : f32
    %66 = vector.broadcast %cst_19 : f32 to vector<24x1xf32>
    %67 = arith.mulf %66, %42 : vector<24x1xf32>
    %68 = arith.mulf %67, %56 : vector<24x1xf32>
    %69 = vector.broadcast %59 : vector<24x1xf32> to vector<24x128xf32>
    %70 = arith.mulf %52, %69 : vector<24x128xf32>
    %71 = vector.broadcast %62 : vector<24x1xf32> to vector<24x128xf32>
    %72 = arith.mulf %28, %71 : vector<24x128xf32>
    %73 = arith.subf %70, %72 : vector<24x128xf32>
    %74 = vector.broadcast %65 : vector<24x1xf32> to vector<24x128xf32>
    %75 = arith.mulf %28, %74 : vector<24x128xf32>
    %76 = vector.broadcast %68 : vector<24x1xf32> to vector<24x128xf32>
    %77 = arith.mulf %52, %76 : vector<24x128xf32>
    %78 = arith.addf %75, %77 : vector<24x128xf32>
    %79 = arith.mulf %73, %73 : vector<24x128xf32>
    %80 = arith.mulf %78, %78 : vector<24x128xf32>
    %81 = arith.addf %79, %80 : vector<24x128xf32>
    %cst_20 = arith.constant 0.000000e+00 : f32
    %82 = vector.shape_cast %24 : vector<24x1xi1> to vector<24x1xi1>
    %83 = vector.broadcast %82 : vector<24x1xi1> to vector<24x128xi1>
    %84 = vector.broadcast %cst_20 : f32 to vector<24x128xf32>
    %85 = arith.select %83, %81, %84 : vector<24x128xi1>, vector<24x128xf32>
    %c0_21 = arith.constant 0 : index
    %c0_22 = arith.constant 0 : index
    %86 = vector.load %arg6[%c0_21, %c0_22] : memref<8x128xf32, #tpu.memory_space<vmem>>, vector<8x128xf32>
    %87 = vector.shape_cast %85 : vector<24x128xf32> to vector<3x8x128xf32>
    %cst_23 = arith.constant dense<0.000000e+00> : vector<8x128xf32>
    %88 = vector.multi_reduction <add>, %87, %cst_23 [0] : vector<3x8x128xf32> to vector<8x128xf32>
    %89 = arith.addf %86, %88 : vector<8x128xf32>
    %c0_24 = arith.constant 0 : index
    %c0_25 = arith.constant 0 : index
    %90 = vector.load %arg6[%c0_24, %c0_25] : memref<8x128xf32, #tpu.memory_space<vmem>>, vector<8x128xf32>
    tpu.vector_store %arg6[%c0_24, %c0_25], %89 {strides = array<i32>} : memref<8x128xf32, #tpu.memory_space<vmem>>, vector<8x128xf32>,
    %c0_26 = arith.constant 0 : index
    %c0_27 = arith.constant 0 : index
    %91 = vector.load %arg7[%c0_26, %c0_27] : memref<1x1xf32, #tpu.memory_space<vmem>>, vector<1x1xf32>
    %cst_28 = arith.constant 1.000000e+00 : f32
    %cst_29 = arith.constant 0.000000e+00 : f32
    %92 = vector.broadcast %cst_28 : f32 to vector<24x1xf32>
    %93 = vector.broadcast %cst_29 : f32 to vector<24x1xf32>
    %94 = arith.select %24, %92, %93 : vector<24x1xi1>, vector<24x1xf32>
    %95 = vector.shape_cast %94 : vector<24x1xf32> to vector<1x24x1xf32>
    %cst_30 = arith.constant dense<0.000000e+00> : vector<1xf32>
    %96 = vector.multi_reduction <add>, %95, %cst_30 [1, 2] : vector<1x24x1xf32> to vector<1xf32>
    %97 = vector.shape_cast %96 : vector<1xf32> to vector<1x1x1xf32>
    %98 = vector.extract %97[0, 0, 0] : f32 from vector<1x1x1xf32>
    %99 = vector.broadcast %98 : f32 to vector<1x1xf32>
    %100 = arith.addf %91, %99 : vector<1x1xf32>
    %c0_31 = arith.constant 0 : index
    %c0_32 = arith.constant 0 : index
    %101 = vector.load %arg7[%c0_31, %c0_32] : memref<1x1xf32, #tpu.memory_space<vmem>>, vector<1x1xf32>
    tpu.vector_store %arg7[%c0_31, %c0_32], %100 {strides = array<i32>} : memref<1x1xf32, #tpu.memory_space<vmem>>, vector<1x1xf32>,
    %c0_i32_33 = arith.constant 0 : i32
    %102 = arith.cmpi eq, %arg1, %c0_i32_33 : i32
    %103 = arith.extui %102 : i1 to i32
    %c0_i32_34 = arith.constant 0 : i32
    %104 = arith.cmpi ne, %103, %c0_i32_34 : i32
    scf.if %104 {
      %c0_35 = arith.constant 0 : index
      %c0_36 = arith.constant 0 : index
      %105 = vector.load %arg6[%c0_35, %c0_36] : memref<8x128xf32, #tpu.memory_space<vmem>>, vector<8x128xf32>
      %cst_37 = arith.constant dense<0.000000e+00> : vector<128xf32>
      %106 = vector.multi_reduction <add>, %105, %cst_37 [0] : vector<8x128xf32> to vector<128xf32>
      %107 = vector.shape_cast %106 : vector<128xf32> to vector<1x128xf32>
      %c0_38 = arith.constant 0 : index
      %c0_39 = arith.constant 0 : index
      %c0_40 = arith.constant 0 : index
      %108 = vector.load %arg4[%c0_38, %c0_39, %c0_40] : memref<1x1x128xf32, #tpu.memory_space<vmem>>, vector<1x1x128xf32>
      %109 = vector.shape_cast %108 : vector<1x1x128xf32> to vector<1x128xf32>
      %110 = vector.shape_cast %107 : vector<1x128xf32> to vector<1x1x128xf32>
      tpu.vector_store %arg4[%c0_38, %c0_39, %c0_40], %110 {strides = array<i32>} : memref<1x1x128xf32, #tpu.memory_space<vmem>>, vector<1x1x128xf32>,
      %c0_41 = arith.constant 0 : index
      %c0_42 = arith.constant 0 : index
      %111 = vector.load %arg7[%c0_41, %c0_42] : memref<1x1xf32, #tpu.memory_space<vmem>>, vector<1x1xf32>
      %c0_43 = arith.constant 0 : index
      %c0_44 = arith.constant 0 : index
      %c0_45 = arith.constant 0 : index
      %112 = vector.load %arg5[%c0_43, %c0_44, %c0_45] : memref<1x1x1xf32, #tpu.memory_space<vmem>>, vector<1x1x1xf32>
      %113 = vector.shape_cast %112 : vector<1x1x1xf32> to vector<1x1xf32>
      %114 = vector.shape_cast %111 : vector<1x1xf32> to vector<1x1x1xf32>
      tpu.vector_store %arg5[%c0_43, %c0_44, %c0_45], %114 {strides = array<i32>} : memref<1x1x1xf32, #tpu.memory_space<vmem>>, vector<1x1x1xf32>,
    } else {
    }
    return
  }
  func.func @transform_0(%arg0: i32, %arg1: i32) -> (i32, i32) {
    %c1_i32 = arith.constant 1 : i32
    %0 = arith.muli %arg0, %c1_i32 : i32
    %1 = arith.addi %0, %arg1 : i32
    %c0_i32 = arith.constant 0 : i32
    %2 = arith.minsi %1, %c0_i32 : i32
    %c0_i32_0 = arith.constant 0 : i32
    %c0_i32_1 = arith.constant 0 : i32
    return %2, %c0_i32_0 : i32, i32
  }
  func.func @transform_1(%arg0: i32, %arg1: i32) -> (i32, i32) {
    %c1_i32 = arith.constant 1 : i32
    %0 = arith.muli %arg0, %c1_i32 : i32
    %1 = arith.addi %0, %arg1 : i32
    %c0_i32 = arith.constant 0 : i32
    %2 = arith.minsi %1, %c0_i32 : i32
    %c0_i32_0 = arith.constant 0 : i32
    %c0_i32_1 = arith.constant 0 : i32
    return %2, %c0_i32_0 : i32, i32
  }
  func.func @transform_2(%arg0: i32, %arg1: i32) -> (i32, i32, i32) {
    %c0_i32 = arith.constant 0 : i32
    %c0_i32_0 = arith.constant 0 : i32
    %c0_i32_1 = arith.constant 0 : i32
    return %arg0, %c0_i32, %c0_i32_0 : i32, i32, i32
  }
  func.func @transform_3(%arg0: i32, %arg1: i32) -> (i32, i32, i32) {
    %c0_i32 = arith.constant 0 : i32
    %c0_i32_0 = arith.constant 0 : i32
    %c0_i32_1 = arith.constant 0 : i32
    return %arg0, %c0_i32, %c0_i32_0 : i32, i32, i32
  }
}

</mosaic_0001>

<llo_original>
// kernel: tpu_custom_call.1
$region0: #{tpu_custom_call.1}
  #allocation0 [shape = 'u32[]', space=smem, size = 0x4, offset = 0x4, fixed_abs, tag = 'smem constant byte address 0x4 - core index']
  #allocation1 [shape = 'u32[144,128]{1,0:T(1,128)}', space=vmem, size = 0x12000, scoped, tag = 'internal scratch']
  #allocation2 [shape = 'f32[8,128]{1,0:T(8,128)}', space=vmem, size = 0x1000, scoped, tag = 'scratch operand']
  #allocation3 [shape = 'f32[1,1]{1,0:T(1,128)}', space=vmem, size = 0x200, scoped, tag = 'scratch operand']
  %s0 = inlined_call_operand.hbm [shape: f32[24,128], index: 0, kind: input, shape index: {}]
  %s1 = inlined_call_operand.hbm [shape: f32[24,128], index: 1, kind: input, shape index: {}]
  %s2 = inlined_call_operand.hbm [shape: f32[1,1,128], index: 2, kind: output, shape index: {0}]
  %s3 = inlined_call_operand.hbm [shape: f32[1,1,1], index: 3, kind: output, shape index: {1}]
  %4 = xla_tuple %s2, %s3
  %s5 = sld [smem:[#allocation0]]
  $region42: #{tpu_custom_call.1} parent=0
    _
  %s7 = ssub.s32 1, %s5
  %s8 = scalar_select 0, %s7, %s5
  $region1: #{tpu_custom_call.1} parent=0
    #allocation4 [shape = 'u8[12288]{0}', space=vmem, size = 0x3000, scoped, tag = 'input window, operand 0, single buffered']
    #allocation5 [shape = 's32[1]{0}', space=sflag, size = 0x4, scoped, tag = 'scoped memory for tpu_custom_call.1']
    #allocation6 [shape = 's32[1]{0}', space=sflag, size = 0x4, scoped, tag = 'scoped memory for tpu_custom_call.1']
    #allocation7 [shape = 'u8[12288]{0}', space=vmem, size = 0x3000, scoped, tag = 'input window, operand 1, single buffered']
    #allocation8 [shape = 's32[1]{0}', space=sflag, size = 0x4, scoped, tag = 'scoped memory for tpu_custom_call.1']
    #allocation9 [shape = 'u8[512]{0}', space=vmem, size = 0x400, scoped, tag = 'output window, operand 0, single buffered']
    #allocation10 [shape = 'u8[512]{0}', space=vmem, size = 0x400, scoped, tag = 'output window, operand 1, single buffered']
    #allocation11 [shape = 's32[1]{0}', space=sflag, size = 0x4, scoped, tag = 'scoped memory for tpu_custom_call.1']
    %9 = vsyncpa [#allocation5], 0
    %10 = vsyncpa [#allocation8], 0
    %11 = vsyncpa [#allocation6], 0
    %12 = vsyncpa [#allocation11], 0
    // Predicated region
    $region2: #{tpu_custom_call.1} parent=1 // pred_check
      _
    $region3: #{tpu_custom_call.1} parent=1 // pred_check_branch
      %14 = sbr.rel (0) target = $region5
    $region4: #{tpu_custom_call.1} parent=1 // pred_region
      %s15 = sadd.s32 0, 0
      %p16 = scmp.lt.s32.totalorder %s15, 0
      %s17 = scalar_select %p16, %s15, 0
      %s18 = smul.u32 3, %s17
      %s20 = ssub.s32 384, 384
      %21 = vsyncadd [#allocation5], %s20
      %s22 = smul.addr %s18, 128
      %s23 = scalar_lea.hbm %s0, %s22
      %s24 = sshll.u32 [#allocation4], 4
      %s25 = int_to_ptr.vmem [resolvable:$true] %s24
      %30 = dma.hbm_to_vmem [thread:$0]  %s23, 384, %s25, [#allocation5], 128, 128, 8
    $region5: #{tpu_custom_call.1} parent=1 // pred_fallthru
      _
    // Predicated region
    $region6: #{tpu_custom_call.1} parent=1 // pred_check
      _
    $region7: #{tpu_custom_call.1} parent=1 // pred_check_branch
      %32 = sbr.rel (0) target = $region9
    $region8: #{tpu_custom_call.1} parent=1 // pred_region
      %s33 = sadd.s32 0, 0
      %p34 = scmp.lt.s32.totalorder %s33, 0
      %s35 = scalar_select %p34, %s33, 0
      %s36 = smul.u32 3, %s35
      %s38 = ssub.s32 384, 384
      %39 = vsyncadd [#allocation8], %s38
      %s40 = smul.addr %s36, 128
      %s41 = scalar_lea.hbm %s1, %s40
      %s42 = sshll.u32 [#allocation7], 4
      %s43 = int_to_ptr.vmem [resolvable:$true] %s42
      %48 = dma.hbm_to_vmem [thread:$0]  %s41, 384, %s43, [#allocation8], 128, 128, 8
    $region9: #{tpu_custom_call.1} parent=1 // pred_fallthru
      _
    // Predicated region
    $region10: #{tpu_custom_call.1} parent=1 // pred_check
      _
    $region11: #{tpu_custom_call.1} parent=1 // pred_check_branch
      %50 = sbr.rel (0) target = $region13
    $region12: #{tpu_custom_call.1} parent=1 // pred_region
      %51 = dma.done [#allocation5], 384
    $region13: #{tpu_custom_call.1} parent=1 // pred_fallthru
      _
    // Predicated region
    $region14: #{tpu_custom_call.1} parent=1 // pred_check
      _
    $region15: #{tpu_custom_call.1} parent=1 // pred_check_branch
      %53 = sbr.rel (0) target = $region17
    $region16: #{tpu_custom_call.1} parent=1 // pred_region
      %54 = dma.done [#allocation8], 384
    $region17: #{tpu_custom_call.1} parent=1 // pred_fallthru
      _
    %s55 = sadd.s32 0, 0
    %p56 = scmp.lt.s32.totalorder %s55, 0
    %s57 = scalar_select %p56, %s55, 0
    %s58 = smul.u32 3, %s57
    %s59 = sadd.s32 0, 0
    %p60 = scmp.lt.s32.totalorder %s59, 0
    %s61 = scalar_select %p60, %s59, 0
    %s62 = smul.u32 3, %s61
    %p63 = scmp.eq.s32.totalorder 0, 0
    // Predicated region
    $region18: #{tpu_custom_call.1} parent=1 // pred_check
      %p64 = pneg %p63
    $region19: #{tpu_custom_call.1} parent=1 // pred_check_branch
      %66 = sbr.rel (%p64) target = $region21
    $region20: #{tpu_custom_call.1} parent=1 // pred_region
      %67 = vst [vmem:[#allocation2] sm:$0xff] 0.0
      %vm68 = vcmask 0
      %69 = vst.msk [vmem:[#allocation3] sm:$0x1] %vm68, 0.0
    $region21: #{tpu_custom_call.1} parent=1 // pred_fallthru
      _
    %v70 = vld [vmem:[#allocation4] sm:$0xff]
    %v71 = vld [vmem:[#allocation4 + $0x8] sm:$0xff]
    %v72 = vld [vmem:[#allocation4 + $0x10] sm:$0xff]
    %v73 = vld [vmem:[#allocation7] sm:$0xff]
    %v74 = vld [vmem:[#allocation7 + $0x8] sm:$0xff]
    %v75 = vld [vmem:[#allocation7 + $0x10] sm:$0xff]
    %v76 = vmul.f32 %v70, %v70
    %v77 = vmul.f32 %v71, %v71
    %v78 = vmul.f32 %v72, %v72
    %79 = vadd.xlane.f32.xlu0 %v76
    %v80 = vpop.xlane.xlu0 %79
    %81 = vadd.xlane.f32.xlu0 %v77
    %v82 = vpop.xlane.xlu0 %81
    %83 = vadd.xlane.f32.xlu0 %v78
    %v84 = vpop.xlane.xlu0 %83
    %v85 = vmul.f32 %v73, %v73
    %v86 = vmul.f32 %v74, %v74
    %v87 = vmul.f32 %v75, %v75
    %88 = vadd.xlane.f32.xlu0 %v85
    %v89 = vpop.xlane.xlu0 %88
    %90 = vadd.xlane.f32.xlu0 %v86
    %v91 = vpop.xlane.xlu0 %90
    %92 = vadd.xlane.f32.xlu0 %v87
    %v93 = vpop.xlane.xlu0 %92
    %v94 = vmul.f32 %v70, %v73
    %v95 = vmul.f32 %v71, %v74
    %v96 = vmul.f32 %v72, %v75
    %97 = vadd.xlane.f32.xlu0 %v94
    %v98 = vpop.xlane.xlu0 %97
    %99 = vadd.xlane.f32.xlu0 %v95
    %v100 = vpop.xlane.xlu0 %99
    %101 = vadd.xlane.f32.xlu0 %v96
    %v102 = vpop.xlane.xlu0 %101
    %s103 = sadd.s32 0, 0
    %s104 = smul.u32 %s103, 24
    %v105 = vlaneseq
    %v106 = vshrl.u32 %v105, 7
    %v107 = vadd.s32 %v106, 8
    %v108 = vadd.s32 %v106, 16
    %v109 = vstv %s104
    %v110 = vadd.s32 %v109, %v106
    %v111 = vadd.s32 %v109, %v107
    %v112 = vadd.s32 %v109, %v108
    %vm113 = vcmp.gt.f32.partialorder %v80, 1e-16
    %vm114 = vcmp.gt.f32.partialorder %v82, 1e-16
    %vm115 = vcmp.gt.f32.partialorder %v84, 1e-16
    %vm116 = vcmp.lt.s32.totalorder %v110, 24
    %vm117 = vcmp.lt.s32.totalorder %v111, 24
    %vm118 = vcmp.lt.s32.totalorder %v112, 24
    %vm119 = vmand %vm113, %vm116
    %vm120 = vmand %vm114, %vm117
    %vm121 = vmand %vm115, %vm118
    %v122 = vrsqrt.pop %v80
    %v123 = vrsqrt.pop %v82
    %v124 = vrsqrt.pop %v84
    %v125 = vrsqrt.pop %v89
    %v126 = vrsqrt.pop %v91
    %v127 = vrsqrt.pop %v93
    %v128 = vmul.f32 %v70, %v122
    %v129 = vmul.f32 %v71, %v123
    %v130 = vmul.f32 %v72, %v124
    %v131 = vmul.f32 %v98, %v122
    %v132 = vmul.f32 %v100, %v123
    %v133 = vmul.f32 %v102, %v124
    %v134 = vmul.f32 %v131, %v125
    %v135 = vmul.f32 %v132, %v126
    %v136 = vmul.f32 %v133, %v127
    %v137 = vmax.f32 %v134, -1.0
    %v138 = vmax.f32 %v135, -1.0
    %v139 = vmax.f32 %v136, -1.0
    %v140 = vmin.f32 %v137, 1.0
    %v141 = vmin.f32 %v138, 1.0
    %v142 = vmin.f32 %v139, 1.0
    %v143 = vmul.f32 %v140, %v140
    %v144 = vmul.f32 %v141, %v141
    %v145 = vmul.f32 %v142, %v142
    %v146 = vsub.f32 1.0, %v143
    %v147 = vsub.f32 1.0, %v144
    %v148 = vsub.f32 1.0, %v145
    %v149 = vmax.f32 %v146, 0.0
    %v150 = vmax.f32 %v147, 0.0
    %v151 = vmax.f32 %v148, 0.0
    %v152 = vrsqrt.pop %v149
    %v153 = vmul.f32 %v149, %v152
    %vm154 = vcmp.eq.f32.partialorder %v149, inf
    %v155 = vsel %vm154, %v149, %v153
    %vm156 = vcmp.eq.f32.partialorder %v149, 0.0
    %v157 = vand.u32 %v149, 2147483648
    %v158 = vsel %vm156, %v157, %v155
    %v159 = vrsqrt.pop %v150
    %v160 = vmul.f32 %v150, %v159
    %vm161 = vcmp.eq.f32.partialorder %v150, inf
    %v162 = vsel %vm161, %v150, %v160
    %vm163 = vcmp.eq.f32.partialorder %v150, 0.0
    %v164 = vand.u32 %v150, 2147483648
    %v165 = vsel %vm163, %v164, %v162
    %v166 = vrsqrt.pop %v151
    %v167 = vmul.f32 %v151, %v166
    %vm168 = vcmp.eq.f32.partialorder %v151, inf
    %v169 = vsel %vm168, %v151, %v167
    %vm170 = vcmp.eq.f32.partialorder %v151, 0.0
    %v171 = vand.u32 %v151, 2147483648
    %v172 = vsel %vm170, %v171, %v169
    %v173 = vsub.f32 %v140, 1.0
    %v174 = vsub.f32 %v141, 1.0
    %v175 = vsub.f32 %v142, 1.0
    %v176 = vmul.f32 %v128, %v131
    %v177 = vmul.f32 %v129, %v132
    %v178 = vmul.f32 %v130, %v133
    %v179 = vsub.f32 %v73, %v176
    %v180 = vsub.f32 %v74, %v177
    %v181 = vsub.f32 %v75, %v178
    %v182 = vmul.f32 %v179, %v179
    %v183 = vmul.f32 %v180, %v180
    %v184 = vmul.f32 %v181, %v181
    %185 = vadd.xlane.f32.xlu0 %v182
    %v186 = vpop.xlane.xlu0 %185
    %187 = vadd.xlane.f32.xlu0 %v183
    %v188 = vpop.xlane.xlu0 %187
    %189 = vadd.xlane.f32.xlu0 %v184
    %v190 = vpop.xlane.xlu0 %189
    %v191 = vrsqrt.pop %v186
    %v192 = vrsqrt.pop %v188
    %v193 = vrsqrt.pop %v190
    %v194 = vmul.f32 %v179, %v191
    %v195 = vmul.f32 %v180, %v192
    %v196 = vmul.f32 %v181, %v193
    %197 = vadd.xlane.f32.xlu0 %v128
    %v198 = vpop.xlane.xlu0 %197
    %199 = vadd.xlane.f32.xlu0 %v129
    %v200 = vpop.xlane.xlu0 %199
    %201 = vadd.xlane.f32.xlu0 %v130
    %v202 = vpop.xlane.xlu0 %201
    %203 = vadd.xlane.f32.xlu0 %v194
    %v204 = vpop.xlane.xlu0 %203
    %205 = vadd.xlane.f32.xlu0 %v195
    %v206 = vpop.xlane.xlu0 %205
    %207 = vadd.xlane.f32.xlu0 %v196
    %v208 = vpop.xlane.xlu0 %207
    %v209 = vmul.f32 %v158, 0.83666
    %v210 = vmul.f32 %v165, 0.83666
    %v211 = vmul.f32 %v172, 0.83666
    %v212 = vmul.f32 %v209, %v198
    %v213 = vmul.f32 %v210, %v200
    %v214 = vmul.f32 %v211, %v202
    %v215 = vmul.f32 %v209, %v204
    %v216 = vmul.f32 %v210, %v206
    %v217 = vmul.f32 %v211, %v208
    %v218 = vmul.f32 %v173, 0.5477226
    %v219 = vmul.f32 %v174, 0.5477226
    %v220 = vmul.f32 %v175, 0.5477226
    %v221 = vmul.f32 %v218, %v198
    %v222 = vmul.f32 %v219, %v200
    %v223 = vmul.f32 %v220, %v202
    %v224 = vmul.f32 %v218, %v204
    %v225 = vmul.f32 %v219, %v206
    %v226 = vmul.f32 %v220, %v208
    %v227 = vmul.f32 %v194, %v212
    %v228 = vmul.f32 %v195, %v213
    %v229 = vmul.f32 %v196, %v214
    %v230 = vmul.f32 %v128, %v215
    %v231 = vmul.f32 %v129, %v216
    %v232 = vmul.f32 %v130, %v217
    %v233 = vsub.f32 %v227, %v230
    %v234 = vsub.f32 %v228, %v231
    %v235 = vsub.f32 %v229, %v232
    %v236 = vmul.f32 %v128, %v221
    %v237 = vmul.f32 %v129, %v222
    %v238 = vmul.f32 %v130, %v223
    %v239 = vmul.f32 %v194, %v224
    %v240 = vmul.f32 %v195, %v225
    %v241 = vmul.f32 %v196, %v226
    %v242 = vadd.f32 %v236, %v239
    %v243 = vadd.f32 %v237, %v240
    %v244 = vadd.f32 %v238, %v241
    %v245 = vmul.f32 %v233, %v233
    %v246 = vmul.f32 %v234, %v234
    %v247 = vmul.f32 %v235, %v235
    %v248 = vmul.f32 %v242, %v242
    %v249 = vmul.f32 %v243, %v243
    %v250 = vmul.f32 %v244, %v244
    %v251 = vadd.f32 %v245, %v248
    %v252 = vadd.f32 %v246, %v249
    %v253 = vadd.f32 %v247, %v250
    %v254 = vsel %vm119, 1, 0
    %v255 = vsel %vm120, 1, 0
    %v256 = vsel %vm121, 1, 0
    %vm257 = vcmp.eq.s32.totalorder %v254, 1
    %vm258 = vcmp.eq.s32.totalorder %v255, 1
    %vm259 = vcmp.eq.s32.totalorder %v256, 1
    %v260 = vsel %vm257, %v251, 0.0
    %v261 = vsel %vm258, %v252, 0.0
    %v262 = vsel %vm259, %v253, 0.0
    %v263 = vld [vmem:[#allocation2] sm:$0xff]
    %v264 = vadd.f32 %v260, %v261
    %v265 = vadd.f32 %v264, %v262
    %v266 = vadd.f32 %v263, %v265
    %267 = vst [vmem:[#allocation2] sm:$0xff] %v266
    %v268 = vld [vmem:[#allocation3] sm:$0x1]
    %v269 = vsel %vm119, 1.0, 0.0
    %v270 = vsel %vm120, 1.0, 0.0
    %v271 = vsel %vm121, 1.0, 0.0
    %vm272 = vcmask 7168
    %v273 = vsel %vm272, %v269, 0.0
    %v274 = vsel %vm272, %v270, 0.0
    %v275 = vadd.f32 %v273, %v274
    %v276 = vsel %vm272, %v271, 0.0
    %v277 = vadd.f32 %v275, %v276
    %278 = vadd.xlane.f32.xlu0 %v277
    %v279 = vpop.xlane.xlu0 %278
    %v280 = vrot.slane %v279, 4
    %v281 = vadd.f32 %v279, %v280
    %v282 = vrot.slane %v281, 2
    %v283 = vadd.f32 %v281, %v282
    %v284 = vrot.slane %v283, 1
    %v285 = vadd.f32 %v283, %v284
    %s286 = vtos %v285
    %v287 = vstv %s286
    %v288 = vadd.f32 %v268, %v287
    %vm289 = vcmask 0
    %290 = vst.msk [vmem:[#allocation3] sm:$0x1] %vm289, %v288
    // Predicated region
    $region22: #{tpu_custom_call.1} parent=1 // pred_check
      %p291 = pneg %p63
    $region23: #{tpu_custom_call.1} parent=1 // pred_check_branch
      %293 = sbr.rel (%p291) target = $region25
    $region24: #{tpu_custom_call.1} parent=1 // pred_region
      %v294 = vld [vmem:[#allocation2] sm:$0xff]
      %v295 = vrot.slane %v294, 4
      %v296 = vadd.f32 %v294, %v295
      %v297 = vrot.slane %v296, 2
      %v298 = vadd.f32 %v296, %v297
      %v299 = vrot.slane %v298, 1
      %v300 = vadd.f32 %v298, %v299
      %301 = vst [vmem:[#allocation9] sm:$0x1] %v300
      %v302 = vld [vmem:[#allocation3] sm:$0x1]
      %303 = vst.msk [vmem:[#allocation10] sm:$0x1] %vm289, %v302
    $region25: #{tpu_custom_call.1} parent=1 // pred_fallthru
      _
    // Predicated region
    $region26: #{tpu_custom_call.1} parent=1 // pred_check
      _
    $region27: #{tpu_custom_call.1} parent=1 // pred_check_branch
      %305 = sbr.rel (0) target = $region29
    $region28: #{tpu_custom_call.1} parent=1 // pred_region
      %s307 = ssub.s32 16, 16
      %308 = vsyncadd [#allocation6], %s307
      %s310 = sshll.u32 [#allocation9], 4
      %s311 = int_to_ptr.vmem [resolvable:$true] %s310
      %313 = dma.vmem_to_hbm [thread:$0]  %s311, 16, %s2, [#allocation6]
    $region29: #{tpu_custom_call.1} parent=1 // pred_fallthru
      _
    // Predicated region
    $region30: #{tpu_custom_call.1} parent=1 // pred_check
      _
    $region31: #{tpu_custom_call.1} parent=1 // pred_check_branch
      %315 = sbr.rel (0) target = $region33
    $region32: #{tpu_custom_call.1} parent=1 // pred_region
      %s317 = ssub.s32 16, 16
      %318 = vsyncadd [#allocation11], %s317
      %s320 = sshll.u32 [#allocation10], 4
      %s321 = int_to_ptr.vmem [resolvable:$true] %s320
      %323 = dma.vmem_to_hbm [thread:$0]  %s321, 16, %s3, [#allocation11]
    $region33: #{tpu_custom_call.1} parent=1 // pred_fallthru
      _
    // Predicated region
    $region34: #{tpu_custom_call.1} parent=1 // pred_check
      _
    $region35: #{tpu_custom_call.1} parent=1 // pred_check_branch
      %325 = sbr.rel (0) target = $region37
    $region36: #{tpu_custom_call.1} parent=1 // pred_region
      %326 = dma.done [#allocation6], 16
    $region37: #{tpu_custom_call.1} parent=1 // pred_fallthru
      _
    // Predicated region
    $region38: #{tpu_custom_call.1} parent=1 // pred_check
      _
    $region39: #{tpu_custom_call.1} parent=1 // pred_check_branch
      %328 = sbr.rel (0) target = $region41
    $region40: #{tpu_custom_call.1} parent=1 // pred_region
      %329 = dma.done [#allocation11], 16
    $region41: #{tpu_custom_call.1} parent=1 // pred_fallthru
      _
    %330 = vsyncpa [#allocation5], 1
    %331 = vsyncpa [#allocation8], 1
    %332 = vsyncpa [#allocation6], 1
    %333 = vsyncpa [#allocation11], 1

</llo_original>
